<compile_context>
chip_gen: v7x
topology: tpu7x:2x2x1
jax: 0.10.0
libtpu: 0.0.40
codegen_flags: <defaults>
</compile_context>

<pallas_src>
import jax
import jax.numpy as jnp
from jax.experimental import pallas as pl
from jax.experimental.pallas import tpu as pltpu


# ----------------------------------------------------------------------------
# Kernel
# ----------------------------------------------------------------------------
def _mlp_kernel(x_ref, w1_ref, b1_ref, w2_ref, b2_ref, w3_ref, b3_ref, o_ref):
    # x_ref: (TB, n_input) bf16; wK_ref bf16 (zero-padded, lane-dense);
    # bK_ref: (1, .) f32.  b3 already carries -1e30 on padded output columns.
    x = x_ref[...]

    # --- lin1 + sigmoid (bf16 MXU operands, f32 accumulate, f32 elementwise) ---
    h1 = jnp.dot(x, w1_ref[...], preferred_element_type=jnp.float32) + b1_ref[...]
    h1 = jax.nn.sigmoid(h1)

    # --- lin2 + sigmoid ---
    h2 = jnp.dot(h1.astype(w2_ref.dtype), w2_ref[...],
                 preferred_element_type=jnp.float32) + b2_ref[...]
    h2 = jax.nn.sigmoid(h2)

    # --- lin3 (padded output columns get logit == -1e30 via b3) ---
    logits = jnp.dot(h2.astype(w3_ref.dtype), w3_ref[...],
                     preferred_element_type=jnp.float32) + b3_ref[...]

    # --- softmax over dim=1 (last axis), numerically stable, exact divide ---
    m = jnp.max(logits, axis=-1, keepdims=True)
    e = jnp.exp(logits - m)                       # padded cols underflow to 0
    denom = jnp.sum(e, axis=-1, keepdims=True)
    o_ref[...] = (e / denom).astype(o_ref.dtype)


# ----------------------------------------------------------------------------
# Helpers
# ----------------------------------------------------------------------------
def _round_up(n, m):
    return ((n + m - 1) // m) * m


def _pad2(a, rows, cols):
    # Zero padding is a correctness invariant (see header comment).
    return jnp.pad(a, ((0, rows - a.shape[0]), (0, cols - a.shape[1])))


def _batch_tile(batch):
    """Per-generation batch tile: multiple of 16 (bf16 sublanes), cap 256
    (128 on v5e); on v7x prefer >=2 blocks so both TensorCores are fed."""
    cap = 256
    want_two_blocks = False
    try:
        kind = jax.devices()[0].device_kind.lower()
        if "v5 lite" in kind or "v5e" in kind or "v5litepod" in kind:
            cap = 128
        if "v7" in kind:
            want_two_blocks = True
    except Exception:
        pass
    tb = min(cap, _round_up(batch, 16))
    if want_two_blocks and batch > 16:
        tb = min(tb, _round_up((batch + 1) // 2, 16))
    return max(tb, 16)


# ----------------------------------------------------------------------------
# One-time parameter prep (pad + cast, done at init time, not per forward)
# ----------------------------------------------------------------------------
def prepare_params(params):
    """params: dict w1,b1,w2,b2,w3,b3 with wK shaped (in, out) and bK (1, out)."""
    w1, b1, w2, b2, w3, b3 = (params[k] for k in ("w1", "b1", "w2", "b2", "w3", "b3"))
    n_input, hidden = w1.shape
    n_output = w3.shape[1]

    H_P = _round_up(hidden, 128)
    OUT_P = _round_up(n_output, 128)

    w1_p = _pad2(w1, n_input, H_P).astype(jnp.bfloat16)
    w2_p = _pad2(w2, H_P, H_P).astype(jnp.bfloat16)
    w3_p = _pad2(w3, H_P, OUT_P).astype(jnp.bfloat16)
    b1_p = _pad2(b1, 1, H_P).astype(jnp.float32)
    b2_p = _pad2(b2, 1, H_P).astype(jnp.float32)
    # Bake the output-column mask into b3: padded w3 columns are zero, so the
    # padded-column logits equal b3 exactly; -1e30 makes them vanish in softmax.
    b3_p = jnp.full((1, OUT_P), -1e30, jnp.float32)
    b3_p = b3_p.at[:, :n_output].set(b3.reshape(1, n_output).astype(jnp.float32))

    return {
        "w1": w1_p, "b1": b1_p, "w2": w2_p, "b2": b2_p, "w3": w3_p, "b3": b3_p,
        "n_input": n_input, "hidden": hidden, "n_output": n_output,
    }


# ----------------------------------------------------------------------------
# Forward wrapper
# ----------------------------------------------------------------------------
def mynetwork_forward(x, prep):
    """x: (B, n_input) float32; prep: output of prepare_params()."""
    B, n_input = x.shape
    assert n_input == prep["n_input"]
    hidden, n_output = prep["hidden"], prep["n_output"]
    w1_p, b1_p = prep["w1"], prep["b1"]
    w2_p, b2_p = prep["w2"], prep["b2"]
    w3_p, b3_p = prep["w3"], prep["b3"]
    H_P = w1_p.shape[1]
    OUT_P = w3_p.shape[1]

    TB = _batch_tile(B)
    B_pad = _round_up(B, TB)
    n_blocks = B_pad // TB

    # Only x is padded/cast per call (batch rows to TB multiple; feature dim
    # stays un-padded -- block == full array dim is legal and saves 8x DMA
    # for small n_input).
    x_p = _pad2(x, B_pad, n_input).astype(jnp.bfloat16)

    # VMEM budget: resident weights/biases are double-buffered by default,
    # plus double-buffered x/out tiles + slack.  Clamp to stay inside v7x's
    # 64 MiB while allowing full residency on v5e/v6e (128 MiB).
    resident = 2 * (w1_p.nbytes + w2_p.nbytes + w3_p.nbytes
                    + b1_p.nbytes + b2_p.nbytes + b3_p.nbytes)
    tiles = 2 * (TB * n_input * 2 + TB * OUT_P * 4)
    vmem_limit = int(min(max(resident + tiles + (8 << 20), 32 << 20), 100 << 20))
    # TODO(synk): for very large hidden on v7x (64 MiB VMEM), switch w2 to a
    # K-tiled reduction axis or single-buffer the constant weight BlockSpecs.

    cost = pl.CostEstimate(
        flops=2 * B * (n_input * hidden + hidden * hidden + hidden * n_output),
        transcendentals=B * (2 * hidden + n_output),
        bytes_accessed=(x_p.size * 2 + w1_p.nbytes + w2_p.nbytes + w3_p.nbytes
                        + b1_p.nbytes + b2_p.nbytes + b3_p.nbytes
                        + B_pad * OUT_P * 4),
    )

    out_padded = pl.pallas_call(
        _mlp_kernel,
        out_shape=jax.ShapeDtypeStruct((B_pad, OUT_P), jnp.float32),
        grid_spec=pltpu.PrefetchScalarGridSpec(
            num_scalar_prefetch=0,
            grid=(n_blocks,),
            in_specs=[
                pl.BlockSpec((TB, n_input), lambda i: (i, 0)),   # x tile
                pl.BlockSpec((n_input, H_P), lambda i: (0, 0)),  # w1 (resident)
                pl.BlockSpec((1, H_P), lambda i: (0, 0)),        # b1 (resident)
                pl.BlockSpec((H_P, H_P), lambda i: (0, 0)),      # w2 (resident)
                pl.BlockSpec((1, H_P), lambda i: (0, 0)),        # b2 (resident)
                pl.BlockSpec((H_P, OUT_P), lambda i: (0, 0)),    # w3 (resident)
                pl.BlockSpec((1, OUT_P), lambda i: (0, 0)),      # b3 (resident)
            ],
            out_specs=pl.BlockSpec((TB, OUT_P), lambda i: (i, 0)),
        ),
        compiler_params=pltpu.CompilerParams(
            dimension_semantics=("parallel",),
            vmem_limit_bytes=vmem_limit,
        ),
        cost_estimate=cost,
    )(x_p, w1_p, b1_p, w2_p, b2_p, w3_p, b3_p)

    return out_padded[:B, :n_output]


# ----------------------------------------------------------------------------
# Parameter init (torch-Linear-like uniform scale) and references
# ----------------------------------------------------------------------------
def init_params(key, n_input, n_output, hidden):
    ks = jax.random.split(key, 6)

    def lin(kw, kb, fan_in, fan_out):
        bound = 1.0 / jnp.sqrt(fan_in)
        w = jax.random.uniform(kw, (fan_in, fan_out), jnp.float32, -bound, bound)
        b = jax.random.uniform(kb, (1, fan_out), jnp.float32, -bound, bound)
        return w, b

    w1, b1 = lin(ks[0], ks[1], n_input, hidden)
    w2, b2 = lin(ks[2], ks[3], hidden, hidden)
    w3, b3 = lin(ks[4], ks[5], hidden, n_output)
    return {"w1": w1, "b1": b1, "w2": w2, "b2": b2, "w3": w3, "b3": b3}


def _reference_forward_f32(x, p):
    h = jax.nn.sigmoid(x @ p["w1"] + p["b1"])
    h = jax.nn.sigmoid(h @ p["w2"] + p["b2"])
    logits = h @ p["w3"] + p["b3"]
    return jax.nn.softmax(logits, axis=1)


def _reference_forward_matched(x, p):
    """Mirrors the kernel's precision: bf16 MXU operands, f32 accumulate."""
    bf = jnp.bfloat16
    h = jax.nn.sigmoid(
        jnp.dot(x.astype(bf), p["w1"].astype(bf), preferred_element_type=jnp.float32)
        + p["b1"])
    h = jax.nn.sigmoid(
        jnp.dot(h.astype(bf), p["w2"].astype(bf), preferred_element_type=jnp.float32)
        + p["b2"])
    logits = (jnp.dot(h.astype(bf), p["w3"].astype(bf),
                      preferred_element_type=jnp.float32) + p["b3"])
    return jax.nn.softmax(logits, axis=1)


# ----------------------------------------------------------------------------
if __name__ == "__main__":
    key = jax.random.PRNGKey(0)
    kx, kp = jax.random.split(key)

    batch, n_input, hidden, n_output = 8, 16, 32, 8
    x = jax.random.normal(kx, (batch, n_input), jnp.float32)
    params = init_params(kp, n_input, n_output, hidden)

    prep = prepare_params(params)          # one-time pad/cast of weights
    out = mynetwork_forward(x, prep)
    out = jax.block_until_ready(out)

    assert out.shape == (batch, n_output)

    # Tight check vs. a precision-matched reference (bf16 operands, f32 acc).
    ref_m = _reference_forward_matched(x, params)
    assert jnp.allclose(out, ref_m, atol=2e-3, rtol=0), "mismatch vs matched ref"

    # Looser check vs. full-f32 reference (bf16 operand quantization).
    ref_f = _reference_forward_f32(x, params)
    assert jnp.allclose(out, ref_f, atol=3e-2, rtol=0), "mismatch vs f32 ref"

    # Softmax rows sum to 1 (exact divide in-kernel, f32 output).
    assert jnp.allclose(jnp.sum(out, axis=1), jnp.ones((batch,)), atol=2e-3)

    print("KERNEL_OK")
</pallas_src>

<mosaic_0001>
module attributes {stable_mosaic.version = 11 : i64} {
  func.func @_mlp_kernel(%arg0: i32, %arg1: memref<16x16xbf16, #tpu.memory_space<vmem>>, %arg2: memref<16x128xbf16, #tpu.memory_space<vmem>>, %arg3: memref<1x128xf32, #tpu.memory_space<vmem>>, %arg4: memref<128x128xbf16, #tpu.memory_space<vmem>>, %arg5: memref<1x128xf32, #tpu.memory_space<vmem>>, %arg6: memref<128x128xbf16, #tpu.memory_space<vmem>>, %arg7: memref<1x128xf32, #tpu.memory_space<vmem>>, %arg8: memref<16x128xf32, #tpu.memory_space<vmem>>) attributes {dimension_semantics = [#tpu.dimension_semantics<parallel>], iteration_bounds = array<i64: 1>, scalar_prefetch = 0 : i64, scratch_operands = 0 : i64, tpu.core_type = #tpu.core_type<tc>, window_params = [{transform_indices = @transform_0, window_bounds = array<i64: 16, 16>}, {pipeline_mode = #tpu.pipeline_mode<synchronous>, transform_indices = @transform_1, window_bounds = array<i64: 16, 128>}, {pipeline_mode = #tpu.pipeline_mode<synchronous>, transform_indices = @transform_2, window_bounds = array<i64: 1, 128>}, {pipeline_mode = #tpu.pipeline_mode<synchronous>, transform_indices = @transform_3, window_bounds = array<i64: 128, 128>}, {pipeline_mode = #tpu.pipeline_mode<synchronous>, transform_indices = @transform_4, window_bounds = array<i64: 1, 128>}, {pipeline_mode = #tpu.pipeline_mode<synchronous>, transform_indices = @transform_5, window_bounds = array<i64: 128, 128>}, {pipeline_mode = #tpu.pipeline_mode<synchronous>, transform_indices = @transform_6, window_bounds = array<i64: 1, 128>}, {transform_indices = @transform_7, window_bounds = array<i64: 16, 128>}]} {
    %c0 = arith.constant 0 : index
    %c0_0 = arith.constant 0 : index
    %0 = vector.load %arg1[%c0, %c0_0] : memref<16x16xbf16, #tpu.memory_space<vmem>>, vector<16x16xbf16>
    %c0_1 = arith.constant 0 : index
    %c0_2 = arith.constant 0 : index
    %1 = vector.load %arg2[%c0_1, %c0_2] : memref<16x128xbf16, #tpu.memory_space<vmem>>, vector<16x128xbf16>
    %cst = arith.constant dense<0.000000e+00> : vector<16x128xf32>
    %2 = tpu.matmul %0, %1, %cst {dimension_numbers = #tpu.dot_dimension_numbers<[1], [0], [0], [1], [0, 0, 1, 1], [], []>} : vector<16x16xbf16>, vector<16x128xbf16>, vector<16x128xf32> -> vector<16x128xf32>
    %c0_3 = arith.constant 0 : index
    %c0_4 = arith.constant 0 : index
    %3 = vector.load %arg3[%c0_3, %c0_4] : memref<1x128xf32, #tpu.memory_space<vmem>>, vector<1x128xf32>
    %4 = vector.broadcast %3 : vector<1x128xf32> to vector<16x128xf32>
    %5 = arith.addf %2, %4 : vector<16x128xf32>
    %6 = arith.negf %5 : vector<16x128xf32>
    %7 = math.exp %6 : vector<16x128xf32>
    %cst_5 = arith.constant 1.000000e+00 : f32
    %8 = vector.broadcast %cst_5 : f32 to vector<16x128xf32>
    %9 = arith.addf %8, %7 : vector<16x128xf32>
    %10 = arith.divf %8, %9 : vector<16x128xf32>
    %11 = arith.truncf %10 : vector<16x128xf32> to vector<16x128xbf16>
    %c0_6 = arith.constant 0 : index
    %c0_7 = arith.constant 0 : index
    %12 = vector.load %arg4[%c0_6, %c0_7] : memref<128x128xbf16, #tpu.memory_space<vmem>>, vector<128x128xbf16>
    %cst_8 = arith.constant dense<0.000000e+00> : vector<16x128xf32>
    %13 = tpu.matmul %11, %12, %cst_8 {dimension_numbers = #tpu.dot_dimension_numbers<[1], [0], [0], [1], [0, 0, 1, 1], [], []>} : vector<16x128xbf16>, vector<128x128xbf16>, vector<16x128xf32> -> vector<16x128xf32>
    %c0_9 = arith.constant 0 : index
    %c0_10 = arith.constant 0 : index
    %14 = vector.load %arg5[%c0_9, %c0_10] : memref<1x128xf32, #tpu.memory_space<vmem>>, vector<1x128xf32>
    %15 = vector.broadcast %14 : vector<1x128xf32> to vector<16x128xf32>
    %16 = arith.addf %13, %15 : vector<16x128xf32>
    %17 = arith.negf %16 : vector<16x128xf32>
    %18 = math.exp %17 : vector<16x128xf32>
    %cst_11 = arith.constant 1.000000e+00 : f32
    %19 = vector.broadcast %cst_11 : f32 to vector<16x128xf32>
    %20 = arith.addf %19, %18 : vector<16x128xf32>
    %21 = arith.divf %19, %20 : vector<16x128xf32>
    %22 = arith.truncf %21 : vector<16x128xf32> to vector<16x128xbf16>
    %c0_12 = arith.constant 0 : index
    %c0_13 = arith.constant 0 : index
    %23 = vector.load %arg6[%c0_12, %c0_13] : memref<128x128xbf16, #tpu.memory_space<vmem>>, vector<128x128xbf16>
    %cst_14 = arith.constant dense<0.000000e+00> : vector<16x128xf32>
    %24 = tpu.matmul %22, %23, %cst_14 {dimension_numbers = #tpu.dot_dimension_numbers<[1], [0], [0], [1], [0, 0, 1, 1], [], []>} : vector<16x128xbf16>, vector<128x128xbf16>, vector<16x128xf32> -> vector<16x128xf32>
    %c0_15 = arith.constant 0 : index
    %c0_16 = arith.constant 0 : index
    %25 = vector.load %arg7[%c0_15, %c0_16] : memref<1x128xf32, #tpu.memory_space<vmem>>, vector<1x128xf32>
    %26 = vector.broadcast %25 : vector<1x128xf32> to vector<16x128xf32>
    %27 = arith.addf %24, %26 : vector<16x128xf32>
    %cst_17 = arith.constant dense<0xFF800000> : vector<16xf32>
    %28 = vector.multi_reduction <maximumf>, %27, %cst_17 [1] : vector<16x128xf32> to vector<16xf32>
    %29 = vector.shape_cast %28 : vector<16xf32> to vector<16x1xf32>
    %30 = vector.broadcast %29 : vector<16x1xf32> to vector<16x128xf32>
    %31 = arith.subf %27, %30 : vector<16x128xf32>
    %32 = math.exp %31 : vector<16x128xf32>
    %cst_18 = arith.constant dense<0.000000e+00> : vector<16xf32>
    %33 = vector.multi_reduction <add>, %32, %cst_18 [1] : vector<16x128xf32> to vector<16xf32>
    %34 = vector.shape_cast %33 : vector<16xf32> to vector<16x1xf32>
    %35 = vector.broadcast %34 : vector<16x1xf32> to vector<16x128xf32>
    %36 = arith.divf %32, %35 : vector<16x128xf32>
    %c0_19 = arith.constant 0 : index
    %c0_20 = arith.constant 0 : index
    %37 = vector.load %arg8[%c0_19, %c0_20] : memref<16x128xf32, #tpu.memory_space<vmem>>, vector<16x128xf32>
    tpu.vector_store %arg8[%c0_19, %c0_20], %36 {strides = array<i32>} : memref<16x128xf32, #tpu.memory_space<vmem>>, vector<16x128xf32>,
    return
  }
  func.func @transform_0(%arg0: i32) -> (i32, i32) {
    %c0_i32 = arith.constant 0 : i32
    %c0_i32_0 = arith.constant 0 : i32
    return %arg0, %c0_i32 : i32, i32
  }
  func.func @transform_1(%arg0: i32) -> (i32, i32) {
    %c0_i32 = arith.constant 0 : i32
    %c0_i32_0 = arith.constant 0 : i32
    %c0_i32_1 = arith.constant 0 : i32
    return %c0_i32, %c0_i32_0 : i32, i32
  }
  func.func @transform_2(%arg0: i32) -> (i32, i32) {
    %c0_i32 = arith.constant 0 : i32
    %c0_i32_0 = arith.constant 0 : i32
    %c0_i32_1 = arith.constant 0 : i32
    return %c0_i32, %c0_i32_0 : i32, i32
  }
  func.func @transform_3(%arg0: i32) -> (i32, i32) {
    %c0_i32 = arith.constant 0 : i32
    %c0_i32_0 = arith.constant 0 : i32
    %c0_i32_1 = arith.constant 0 : i32
    return %c0_i32, %c0_i32_0 : i32, i32
  }
  func.func @transform_4(%arg0: i32) -> (i32, i32) {
    %c0_i32 = arith.constant 0 : i32
    %c0_i32_0 = arith.constant 0 : i32
    %c0_i32_1 = arith.constant 0 : i32
    return %c0_i32, %c0_i32_0 : i32, i32
  }
  func.func @transform_5(%arg0: i32) -> (i32, i32) {
    %c0_i32 = arith.constant 0 : i32
    %c0_i32_0 = arith.constant 0 : i32
    %c0_i32_1 = arith.constant 0 : i32
    return %c0_i32, %c0_i32_0 : i32, i32
  }
  func.func @transform_6(%arg0: i32) -> (i32, i32) {
    %c0_i32 = arith.constant 0 : i32
    %c0_i32_0 = arith.constant 0 : i32
    %c0_i32_1 = arith.constant 0 : i32
    return %c0_i32, %c0_i32_0 : i32, i32
  }
  func.func @transform_7(%arg0: i32) -> (i32, i32) {
    %c0_i32 = arith.constant 0 : i32
    %c0_i32_0 = arith.constant 0 : i32
    return %arg0, %c0_i32 : i32, i32
  }
}

</mosaic_0001>

<llo_original>
// kernel: tpu_custom_call.1
$region0: #{tpu_custom_call.1}
  #allocation0 [shape = 'u32[]', space=smem, size = 0x4, offset = 0x4, fixed_abs, tag = 'smem constant byte address 0x4 - core index']
  #allocation1 [shape = 'u32[144,128]{1,0:T(1,128)}', space=vmem, size = 0x12000, scoped, tag = 'internal scratch']
  %s0 = inlined_call_operand.hbm [shape: bf16[16,16], index: 0, kind: input, shape index: {}]
  %s1 = inlined_call_operand.hbm [shape: bf16[16,128], index: 1, kind: input, shape index: {}]
  %s2 = inlined_call_operand.vmem [shape: f32[1,128], index: 2, kind: input, shape index: {}]
  %s3 = inlined_call_operand.hbm [shape: bf16[128,128], index: 3, kind: input, shape index: {}]
  %s4 = inlined_call_operand.vmem [shape: f32[1,128], index: 4, kind: input, shape index: {}]
  %s5 = inlined_call_operand.hbm [shape: bf16[128,128], index: 5, kind: input, shape index: {}]
  %s6 = inlined_call_operand.vmem [shape: f32[1,128], index: 6, kind: input, shape index: {}]
  %s7 = inlined_call_operand.hbm [shape: f32[16,128], index: 7, kind: output, shape index: {}]
  %s8 = sld [smem:[#allocation0]]
  $region54: #{tpu_custom_call.1} parent=0
    _
  %s10 = ssub.s32 1, %s8
  %s11 = scalar_select 0, %s10, %s8
  $region1: #{tpu_custom_call.1} parent=0
    #allocation2 [shape = 'u8[4096]{0}', space=vmem, size = 0x1000, scoped, tag = 'input window, operand 0, single buffered']
    #allocation3 [shape = 's32[1]{0}', space=sflag, size = 0x4, scoped, tag = 'scoped memory for tpu_custom_call.1']
    #allocation4 [shape = 's32[1]{0}', space=sflag, size = 0x4, scoped, tag = 'scoped memory for tpu_custom_call.1']
    #allocation5 [shape = 'u8[4096]{0}', space=vmem, size = 0x1000, scoped, tag = 'input window, operand 1, single buffered']
    #allocation6 [shape = 's32[1]{0}', space=sflag, size = 0x4, scoped, tag = 'scoped memory for tpu_custom_call.1']
    #allocation7 [shape = 'u8[32768]{0}', space=vmem, size = 0x8000, scoped, tag = 'input window, operand 3, single buffered']
    #allocation8 [shape = 'u8[32768]{0}', space=vmem, size = 0x8000, scoped, tag = 'input window, operand 5, single buffered']
    #allocation9 [shape = 's32[1]{0}', space=sflag, size = 0x4, scoped, tag = 'scoped memory for tpu_custom_call.1']
    #allocation10 [shape = 'u8[8192]{0}', space=vmem, size = 0x2000, scoped, tag = 'output window, operand 0, single buffered']
    %12 = vsyncpa [#allocation3], 0
    %13 = vsyncpa [#allocation6], 0
    %14 = vsyncpa [#allocation9], 0
    %15 = vsyncpa [#allocation4], 0
    // Predicated region
    $region2: #{tpu_custom_call.1} parent=1 // pred_check
      _
    $region3: #{tpu_custom_call.1} parent=1 // pred_check_branch
      %17 = sbr.rel (0) target = $region5
    $region4: #{tpu_custom_call.1} parent=1 // pred_region
      %s19 = ssub.s32 128, 128
      %20 = vsyncadd [#allocation3], %s19
      %s21 = sshll.u32 [#allocation2], 4
      %s22 = int_to_ptr.vmem [resolvable:$true] %s21
      %27 = dma.hbm_to_vmem [thread:$0]  %s0, 128, %s22, [#allocation3], 64, 64, 4
    $region5: #{tpu_custom_call.1} parent=1 // pred_fallthru
      _
    // Predicated region
    $region6: #{tpu_custom_call.1} parent=1 // pred_check
      _
    $region7: #{tpu_custom_call.1} parent=1 // pred_check_branch
      %29 = sbr.rel (0) target = $region9
    $region8: #{tpu_custom_call.1} parent=1 // pred_region
      %s31 = ssub.s32 128, 128
      %32 = vsyncadd [#allocation6], %s31
      %s33 = sshll.u32 [#allocation5], 4
      %s34 = int_to_ptr.vmem [resolvable:$true] %s33
      %39 = dma.hbm_to_vmem [thread:$0]  %s1, 128, %s34, [#allocation6], 64, 64, 4
    $region9: #{tpu_custom_call.1} parent=1 // pred_fallthru
      _
    // Predicated region
    $region10: #{tpu_custom_call.1} parent=1 // pred_check
      _
    $region11: #{tpu_custom_call.1} parent=1 // pred_check_branch
      %41 = sbr.rel (0) target = $region13
    $region12: #{tpu_custom_call.1} parent=1 // pred_region
      _
    $region13: #{tpu_custom_call.1} parent=1 // pred_fallthru
      _
    // Predicated region
    $region14: #{tpu_custom_call.1} parent=1 // pred_check
      _
    $region15: #{tpu_custom_call.1} parent=1 // pred_check_branch
      %43 = sbr.rel (0) target = $region17
    $region16: #{tpu_custom_call.1} parent=1 // pred_region
      %s45 = ssub.s32 1024, 1024
      %46 = vsyncadd [#allocation6], %s45
      %s47 = sshll.u32 [#allocation7], 4
      %s48 = int_to_ptr.vmem [resolvable:$true] %s47
      %53 = dma.hbm_to_vmem [thread:$0]  %s3, 1024, %s48, [#allocation6], 64, 64, 4
    $region17: #{tpu_custom_call.1} parent=1 // pred_fallthru
      _
    // Predicated region
    $region18: #{tpu_custom_call.1} parent=1 // pred_check
      _
    $region19: #{tpu_custom_call.1} parent=1 // pred_check_branch
      %55 = sbr.rel (0) target = $region21
    $region20: #{tpu_custom_call.1} parent=1 // pred_region
      _
    $region21: #{tpu_custom_call.1} parent=1 // pred_fallthru
      _
    // Predicated region
    $region22: #{tpu_custom_call.1} parent=1 // pred_check
      _
    $region23: #{tpu_custom_call.1} parent=1 // pred_check_branch
      %57 = sbr.rel (0) target = $region25
    $region24: #{tpu_custom_call.1} parent=1 // pred_region
      %s59 = ssub.s32 1024, 1024
      %60 = vsyncadd [#allocation9], %s59
      %s61 = sshll.u32 [#allocation8], 4
      %s62 = int_to_ptr.vmem [resolvable:$true] %s61
      %67 = dma.hbm_to_vmem [thread:$0]  %s5, 1024, %s62, [#allocation9], 64, 64, 4
    $region25: #{tpu_custom_call.1} parent=1 // pred_fallthru
      _
    // Predicated region
    $region26: #{tpu_custom_call.1} parent=1 // pred_check
      _
    $region27: #{tpu_custom_call.1} parent=1 // pred_check_branch
      %69 = sbr.rel (0) target = $region29
    $region28: #{tpu_custom_call.1} parent=1 // pred_region
      _
    $region29: #{tpu_custom_call.1} parent=1 // pred_fallthru
      _
    // Predicated region
    $region30: #{tpu_custom_call.1} parent=1 // pred_check
      _
    $region31: #{tpu_custom_call.1} parent=1 // pred_check_branch
      %71 = sbr.rel (0) target = $region33
    $region32: #{tpu_custom_call.1} parent=1 // pred_region
      %72 = dma.done [#allocation3], 128
    $region33: #{tpu_custom_call.1} parent=1 // pred_fallthru
      _
    // Predicated region
    $region34: #{tpu_custom_call.1} parent=1 // pred_check
      _
    $region35: #{tpu_custom_call.1} parent=1 // pred_check_branch
      %74 = sbr.rel (0) target = $region37
    $region36: #{tpu_custom_call.1} parent=1 // pred_region
      %75 = dma.done [#allocation6], 128
    $region37: #{tpu_custom_call.1} parent=1 // pred_fallthru
      _
    // Predicated region
    $region38: #{tpu_custom_call.1} parent=1 // pred_check
      _
    $region39: #{tpu_custom_call.1} parent=1 // pred_check_branch
      %77 = sbr.rel (0) target = $region41
    $region40: #{tpu_custom_call.1} parent=1 // pred_region
      %78 = dma.done [#allocation6], 1024
    $region41: #{tpu_custom_call.1} parent=1 // pred_fallthru
      _
    // Predicated region
    $region42: #{tpu_custom_call.1} parent=1 // pred_check
      _
    $region43: #{tpu_custom_call.1} parent=1 // pred_check_branch
      %80 = sbr.rel (0) target = $region45
    $region44: #{tpu_custom_call.1} parent=1 // pred_region
      %81 = dma.done [#allocation9], 1024
    $region45: #{tpu_custom_call.1} parent=1 // pred_fallthru
      _
    %v83 = vld [vmem:[#allocation2] sm:$0xf]
    %v84 = vld [vmem:[#allocation2 + $0x4] sm:$0xf]
    %v85 = vld [vmem:[#allocation5] sm:$0xf]
    %v86 = vld [vmem:[#allocation5 + $0x4] sm:$0xf]
    %v87 = vld [vmem:[%s2] sm:$0x1]
    %v89 = vlaneseq
    %v90 = vshrl.u32 %v89, 7
    %v91 = vsub.s32 0, %v90
    %v92 = vrot.slane %v87, %v91
    %v96 = vunpack.c.l.b16 %v83
    %v97 = vunpack.c.l.b16 %v84
    %v98 = vpack.c.b16 %v97, %v96
    %v101 = vunpack.c.l.b16 %v85
    %v102 = vunpack.c.l.b16 %v86
    %v103 = vpack.c.b16 %v102, %v101
    %vm105 = vcmask 130048
    %v107 = vsel %vm105, %v98, 0
    %109 = vmatprep.subr.bf16.mxu0 0
    %110 = vmatpush1.bf16.msra.mxu0 %v103
    %111 = vmatprep.subr.bf16.mxu0 0
    %112 = vmatpush1.bf16.msra.mxu0 0
    %113 = vmatprep.subr.bf16.mxu0 0
    %114 = vmatpush1.bf16.msra.mxu0 0
    %115 = vmatprep.subr.bf16.mxu0 0
    %116 = vmatpush1.bf16.msra.mxu0 0
    %117 = vmatprep.subr.bf16.mxu0 0
    %118 = vmatpush1.bf16.msra.mxu0 0
    %119 = vmatprep.subr.bf16.mxu0 0
    %120 = vmatpush1.bf16.msra.mxu0 0
    %121 = vmatprep.subr.bf16.mxu0 0
    %122 = vmatpush1.bf16.msra.mxu0 0
    %123 = vmatprep.subr.bf16.mxu0 0
    %124 = vmatpush1.bf16.msra.mxu0 0
    %125 = vmatprep.subr.bf16.mxu0 0
    %126 = vmatpush1.bf16.msra.mxu0 0
    %127 = vmatprep.subr.bf16.mxu0 0
    %128 = vmatpush1.bf16.msra.mxu0 0
    %129 = vmatprep.subr.bf16.mxu0 0
    %130 = vmatpush1.bf16.msra.mxu0 0
    %131 = vmatprep.subr.bf16.mxu0 0
    %132 = vmatpush1.bf16.msra.mxu0 0
    %133 = vmatprep.subr.bf16.mxu0 0
    %134 = vmatpush1.bf16.msra.mxu0 0
    %135 = vmatprep.subr.bf16.mxu0 0
    %136 = vmatpush1.bf16.msra.mxu0 0
    %137 = vmatprep.subr.bf16.mxu0 0
    %138 = vmatpush1.bf16.msra.mxu0 0
    %139 = vmatprep.subr.bf16.mxu0 0
    %140 = vmatpush1.bf16.msra.mxu0 0
    %141 = vmatprep.mubr.bf16.mxu0 0
    %142 = vmatmul.mubr.bf16.gmra.mrb[0].mxu0 %v107
    %v143 = vpop.f32.mrb[0].mxu0
    %v144 = vadd.f32 %v92, %v143
    %v145 = vpop.f32.mrb[0].mxu0
    %v146 = vpop.f32.mrb[0].mxu0
    %v147 = vadd.f32 %v92, %v146
    %v148 = vpop.f32.mrb[0].mxu0
    %149 = vdwg.mxu0
    %v150 = vxor.u32 %v144, 2147483648
    %v151 = vxor.u32 %v147, 2147483648
    %v152 = vmul.f32 %v150, 1.442695
    %v153 = vpow.pop %v152
    %v154 = vmul.f32 %v151, 1.442695
    %v155 = vpow.pop %v154
    %v156 = vadd.f32 %v153, 1.0
    %v157 = vadd.f32 %v155, 1.0
    %v158 = vrcp.pop %v156
    %v159 = vmul.f32 1.0, %v158
    %v160 = vrcp.pop %v157
    %v161 = vmul.f32 1.0, %v160
    %v162 = vpack.c.bf16 %v161, %v159
    %v163 = vld [vmem:[#allocation7] sm:$0xf]
    %v164 = vld [vmem:[#allocation7 + $0x4] sm:$0xf]
    %v165 = vld [vmem:[#allocation7 + $0x8] sm:$0xf]
    %v166 = vld [vmem:[#allocation7 + $0xc] sm:$0xf]
    %v167 = vld [vmem:[#allocation7 + $0x10] sm:$0xf]
    %v168 = vld [vmem:[#allocation7 + $0x14] sm:$0xf]
    %v169 = vld [vmem:[#allocation7 + $0x18] sm:$0xf]
    %v170 = vld [vmem:[#allocation7 + $0x1c] sm:$0xf]
    %v171 = vld [vmem:[#allocation7 + $0x20] sm:$0xf]
    %v172 = vld [vmem:[#allocation7 + $0x24] sm:$0xf]
    %v173 = vld [vmem:[#allocation7 + $0x28] sm:$0xf]
    %v174 = vld [vmem:[#allocation7 + $0x2c] sm:$0xf]
    %v175 = vld [vmem:[#allocation7 + $0x30] sm:$0xf]
    %v176 = vld [vmem:[#allocation7 + $0x34] sm:$0xf]
    %v177 = vld [vmem:[#allocation7 + $0x38] sm:$0xf]
    %v178 = vld [vmem:[#allocation7 + $0x3c] sm:$0xf]
    %v179 = vld [vmem:[%s4] sm:$0x1]
    %v181 = vlaneseq
    %v182 = vshrl.u32 %v181, 7
    %v183 = vsub.s32 0, %v182
    %v184 = vrot.slane %v179, %v183
    %v202 = vunpack.c.l.b16 %v163
    %v203 = vunpack.c.l.b16 %v164
    %v204 = vunpack.c.l.b16 %v165
    %v205 = vunpack.c.l.b16 %v166
    %v206 = vunpack.c.l.b16 %v167
    %v207 = vunpack.c.l.b16 %v168
    %v208 = vunpack.c.l.b16 %v169
    %v209 = vunpack.c.l.b16 %v170
    %v210 = vunpack.c.l.b16 %v171
    %v211 = vunpack.c.l.b16 %v172
    %v212 = vunpack.c.l.b16 %v173
    %v213 = vunpack.c.l.b16 %v174
    %v214 = vunpack.c.l.b16 %v175
    %v215 = vunpack.c.l.b16 %v176
    %v216 = vunpack.c.l.b16 %v177
    %v217 = vunpack.c.l.b16 %v178
    %v218 = vpack.c.b16 %v203, %v202
    %v219 = vpack.c.b16 %v205, %v204
    %v220 = vpack.c.b16 %v207, %v206
    %v221 = vpack.c.b16 %v209, %v208
    %v222 = vpack.c.b16 %v211, %v210
    %v223 = vpack.c.b16 %v213, %v212
    %v224 = vpack.c.b16 %v215, %v214
    %v225 = vpack.c.b16 %v217, %v216
    %234 = vmatprep.subr.bf16.mxu0 0
    %235 = vmatpush1.bf16.msra.mxu0 %v218
    %236 = vmatprep.subr.bf16.mxu0 0
    %237 = vmatpush1.bf16.msra.mxu0 %v219
    %238 = vmatprep.subr.bf16.mxu0 0
    %239 = vmatpush1.bf16.msra.mxu0 %v220
    %240 = vmatprep.subr.bf16.mxu0 0
    %241 = vmatpush1.bf16.msra.mxu0 %v221
    %242 = vmatprep.subr.bf16.mxu0 0
    %243 = vmatpush1.bf16.msra.mxu0 %v222
    %244 = vmatprep.subr.bf16.mxu0 0
    %245 = vmatpush1.bf16.msra.mxu0 %v223
    %246 = vmatprep.subr.bf16.mxu0 0
    %247 = vmatpush1.bf16.msra.mxu0 %v224
    %248 = vmatprep.subr.bf16.mxu0 0
    %249 = vmatpush1.bf16.msra.mxu0 %v225
    %250 = vmatprep.subr.bf16.mxu0 0
    %251 = vmatpush1.bf16.msra.mxu0 0
    %252 = vmatprep.subr.bf16.mxu0 0
    %253 = vmatpush1.bf16.msra.mxu0 0
    %254 = vmatprep.subr.bf16.mxu0 0
    %255 = vmatpush1.bf16.msra.mxu0 0
    %256 = vmatprep.subr.bf16.mxu0 0
    %257 = vmatpush1.bf16.msra.mxu0 0
    %258 = vmatprep.subr.bf16.mxu0 0
    %259 = vmatpush1.bf16.msra.mxu0 0
    %260 = vmatprep.subr.bf16.mxu0 0
    %261 = vmatpush1.bf16.msra.mxu0 0
    %262 = vmatprep.subr.bf16.mxu0 0
    %263 = vmatpush1.bf16.msra.mxu0 0
    %264 = vmatprep.subr.bf16.mxu0 0
    %265 = vmatpush1.bf16.msra.mxu0 0
    %266 = vmatprep.mubr.bf16.mxu0 0
    %267 = vmatmul.mubr.bf16.gmra.mrb[0].mxu0 %v162
    %v268 = vpop.f32.mrb[0].mxu0
    %v269 = vadd.f32 %v184, %v268
    %v270 = vpop.f32.mrb[0].mxu0
    %v271 = vpop.f32.mrb[0].mxu0
    %v272 = vadd.f32 %v184, %v271
    %v273 = vpop.f32.mrb[0].mxu0
    %274 = vdwg.mxu0
    %v275 = vxor.u32 %v269, 2147483648
    %v276 = vxor.u32 %v272, 2147483648
    %v277 = vmul.f32 %v275, 1.442695
    %v278 = vpow.pop %v277
    %v279 = vmul.f32 %v276, 1.442695
    %v280 = vpow.pop %v279
    %v281 = vadd.f32 %v278, 1.0
    %v282 = vadd.f32 %v280, 1.0
    %v283 = vrcp.pop %v281
    %v284 = vmul.f32 1.0, %v283
    %v285 = vrcp.pop %v282
    %v286 = vmul.f32 1.0, %v285
    %v287 = vpack.c.bf16 %v286, %v284
    %v288 = vld [vmem:[#allocation8] sm:$0xf]
    %v289 = vld [vmem:[#allocation8 + $0x4] sm:$0xf]
    %v290 = vld [vmem:[#allocation8 + $0x8] sm:$0xf]
    %v291 = vld [vmem:[#allocation8 + $0xc] sm:$0xf]
    %v292 = vld [vmem:[#allocation8 + $0x10] sm:$0xf]
    %v293 = vld [vmem:[#allocation8 + $0x14] sm:$0xf]
    %v294 = vld [vmem:[#allocation8 + $0x18] sm:$0xf]
    %v295 = vld [vmem:[#allocation8 + $0x1c] sm:$0xf]
    %v296 = vld [vmem:[#allocation8 + $0x20] sm:$0xf]
    %v297 = vld [vmem:[#allocation8 + $0x24] sm:$0xf]
    %v298 = vld [vmem:[#allocation8 + $0x28] sm:$0xf]
    %v299 = vld [vmem:[#allocation8 + $0x2c] sm:$0xf]
    %v300 = vld [vmem:[#allocation8 + $0x30] sm:$0xf]
    %v301 = vld [vmem:[#allocation8 + $0x34] sm:$0xf]
    %v302 = vld [vmem:[#allocation8 + $0x38] sm:$0xf]
    %v303 = vld [vmem:[#allocation8 + $0x3c] sm:$0xf]
    %v304 = vld [vmem:[%s6] sm:$0x1]
    %v306 = vlaneseq
    %v307 = vshrl.u32 %v306, 7
    %v308 = vsub.s32 0, %v307
    %v309 = vrot.slane %v304, %v308
    %v327 = vunpack.c.l.b16 %v288
    %v328 = vunpack.c.l.b16 %v289
    %v329 = vunpack.c.l.b16 %v290
    %v330 = vunpack.c.l.b16 %v291
    %v331 = vunpack.c.l.b16 %v292
    %v332 = vunpack.c.l.b16 %v293
    %v333 = vunpack.c.l.b16 %v294
    %v334 = vunpack.c.l.b16 %v295
    %v335 = vunpack.c.l.b16 %v296
    %v336 = vunpack.c.l.b16 %v297
    %v337 = vunpack.c.l.b16 %v298
    %v338 = vunpack.c.l.b16 %v299
    %v339 = vunpack.c.l.b16 %v300
    %v340 = vunpack.c.l.b16 %v301
    %v341 = vunpack.c.l.b16 %v302
    %v342 = vunpack.c.l.b16 %v303
    %v343 = vpack.c.b16 %v328, %v327
    %v344 = vpack.c.b16 %v330, %v329
    %v345 = vpack.c.b16 %v332, %v331
    %v346 = vpack.c.b16 %v334, %v333
    %v347 = vpack.c.b16 %v336, %v335
    %v348 = vpack.c.b16 %v338, %v337
    %v349 = vpack.c.b16 %v340, %v339
    %v350 = vpack.c.b16 %v342, %v341
    %359 = vmatprep.subr.bf16.mxu0 0
    %360 = vmatpush1.bf16.msra.mxu0 %v343
    %361 = vmatprep.subr.bf16.mxu0 0
    %362 = vmatpush1.bf16.msra.mxu0 %v344
    %363 = vmatprep.subr.bf16.mxu0 0
    %364 = vmatpush1.bf16.msra.mxu0 %v345
    %365 = vmatprep.subr.bf16.mxu0 0
    %366 = vmatpush1.bf16.msra.mxu0 %v346
    %367 = vmatprep.subr.bf16.mxu0 0
    %368 = vmatpush1.bf16.msra.mxu0 %v347
    %369 = vmatprep.subr.bf16.mxu0 0
    %370 = vmatpush1.bf16.msra.mxu0 %v348
    %371 = vmatprep.subr.bf16.mxu0 0
    %372 = vmatpush1.bf16.msra.mxu0 %v349
    %373 = vmatprep.subr.bf16.mxu0 0
    %374 = vmatpush1.bf16.msra.mxu0 %v350
    %375 = vmatprep.subr.bf16.mxu0 0
    %376 = vmatpush1.bf16.msra.mxu0 0
    %377 = vmatprep.subr.bf16.mxu0 0
    %378 = vmatpush1.bf16.msra.mxu0 0
    %379 = vmatprep.subr.bf16.mxu0 0
    %380 = vmatpush1.bf16.msra.mxu0 0
    %381 = vmatprep.subr.bf16.mxu0 0
    %382 = vmatpush1.bf16.msra.mxu0 0
    %383 = vmatprep.subr.bf16.mxu0 0
    %384 = vmatpush1.bf16.msra.mxu0 0
    %385 = vmatprep.subr.bf16.mxu0 0
    %386 = vmatpush1.bf16.msra.mxu0 0
    %387 = vmatprep.subr.bf16.mxu0 0
    %388 = vmatpush1.bf16.msra.mxu0 0
    %389 = vmatprep.subr.bf16.mxu0 0
    %390 = vmatpush1.bf16.msra.mxu0 0
    %391 = vmatprep.mubr.bf16.mxu0 0
    %392 = vmatmul.mubr.bf16.gmra.mrb[0].mxu0 %v287
    %v393 = vpop.f32.mrb[0].mxu0
    %v394 = vadd.f32 %v309, %v393
    %v395 = vpop.f32.mrb[0].mxu0
    %v396 = vpop.f32.mrb[0].mxu0
    %v397 = vadd.f32 %v309, %v396
    %v398 = vpop.f32.mrb[0].mxu0
    %399 = vdwg.mxu0
    %400 = vmax.xlane.f32.xlu0 %v394
    %v401 = vpop.xlane.xlu0 %400
    %402 = vmax.xlane.f32.xlu0 %v397
    %v403 = vpop.xlane.xlu0 %402
    %v404 = vsub.f32 %v394, %v401
    %v405 = vsub.f32 %v397, %v403
    %v406 = vmul.f32 %v404, 1.442695
    %v407 = vpow.pop %v406
    %v408 = vmul.f32 %v405, 1.442695
    %v409 = vpow.pop %v408
    %410 = vadd.xlane.f32.xlu0 %v407
    %v411 = vpop.xlane.xlu0 %410
    %412 = vadd.xlane.f32.xlu0 %v409
    %v413 = vpop.xlane.xlu0 %412
    %v414 = vrcp.pop %v411
    %v415 = vmul.f32 %v407, %v414
    %v416 = vrcp.pop %v413
    %v417 = vmul.f32 %v409, %v416
    %418 = vst [vmem:[#allocation10] sm:$0xff] %v415
    %419 = vst [vmem:[#allocation10 + $0x8] sm:$0xff] %v417
    // Predicated region
    $region46: #{tpu_custom_call.1} parent=1 // pred_check
      _
    $region47: #{tpu_custom_call.1} parent=1 // pred_check_branch
      %421 = sbr.rel (0) target = $region49
    $region48: #{tpu_custom_call.1} parent=1 // pred_region
      %s423 = ssub.s32 256, 256
      %424 = vsyncadd [#allocation4], %s423
      %s425 = sshll.u32 [#allocation10], 4
      %s426 = int_to_ptr.vmem [resolvable:$true] %s425
      %431 = dma.vmem_to_hbm [thread:$0]  %s426, 256, %s7, [#allocation4], 128, 128, 8
    $region49: #{tpu_custom_call.1} parent=1 // pred_fallthru
      _
    // Predicated region
    $region50: #{tpu_custom_call.1} parent=1 // pred_check
      _
    $region51: #{tpu_custom_call.1} parent=1 // pred_check_branch
      %433 = sbr.rel (0) target = $region53
    $region52: #{tpu_custom_call.1} parent=1 // pred_region
      %434 = dma.done [#allocation4], 256
    $region53: #{tpu_custom_call.1} parent=1 // pred_fallthru
      _
    %435 = vsyncpa [#allocation3], 1
    %436 = vsyncpa [#allocation6], 1
    %437 = vsyncpa [#allocation9], 1
    %438 = vsyncpa [#allocation4], 1

</llo_original>
